<compile_context>
chip_gen: v6e
topology: v6e:2x2x1
jax: 0.10.0
libtpu: 0.0.40
codegen_flags: <defaults>
</compile_context>

<pallas_src>
import jax
import jax.numpy as jnp
from jax.experimental import pallas as pl
from jax.experimental.pallas import tpu as pltpu


def conv_block_kernel(cols_ref, w_ref, b_ref, o_ref):
    """Fused im2col-matmul + bias + ReLU for one M-block.

    cols_ref: (Kdim, M_blk)  bf16  im2col patches, lane-dense (M in lanes)
    w_ref:    (Cout, Kdim)   bf16  flattened conv weight
    b_ref:    (Cout, 1)      f32   bias column
    o_ref:    (Cout, M_blk)  f32   lane-dense output block
    """
    acc = jnp.dot(w_ref[...], cols_ref[...],
                  preferred_element_type=jnp.float32)   # (Cout, M_blk) f32
    acc = jnp.maximum(acc + b_ref[...], 0.0)            # bias + ReLU in f32
    o_ref[...] = acc.astype(o_ref.dtype)


def conv_block(x_nchw, w_oihw, bias, *, stride, padding):
    """ConvBlock forward: Conv2d(stride, padding, bias=True) -> ReLU."""
    N, Cin, H, W = x_nchw.shape
    Cout, _, KH, KW = w_oihw.shape
    Ho = (H + 2 * padding - KH) // stride + 1
    Wo = (W + 2 * padding - KW) // stride + 1
    M = N * Ho * Wo
    Kdim = KH * KW * Cin

    # ---- wrapper-side glue (plain XLA): layout conversion + pad + im2col ----
    x_nhwc = jnp.transpose(x_nchw, (0, 2, 3, 1))
    x_pad = jnp.pad(x_nhwc,
                    ((0, 0), (padding, padding), (padding, padding), (0, 0)))
    taps = []
    for kh in range(KH):
        for kw in range(KW):
            taps.append(x_pad[:,
                              kh:kh + stride * (Ho - 1) + 1:stride,
                              kw:kw + stride * (Wo - 1) + 1:stride,
                              :])                        # (N, Ho, Wo, Cin)
    # (M, Kdim) with K-index = kh*KW*Cin + kw*Cin + cin, then lane-dense (Kdim, M)
    cols = jnp.concatenate(taps, axis=-1).reshape(M, Kdim)
    cols_t = jnp.transpose(cols, (1, 0)).astype(jnp.bfloat16)      # (Kdim, M)
    # weight flattened to (Cout, Kdim) with matching K ordering (O,KH,KW,I)
    w_flat = jnp.transpose(w_oihw, (0, 2, 3, 1)).reshape(Cout, Kdim)
    w_bf = w_flat.astype(jnp.bfloat16)
    b_col = bias.astype(jnp.float32).reshape(Cout, 1)

    # 2-way "parallel" M-split: feeds both TensorCores on v7x; on single-TC
    # v5e/v6e it is just one extra (cheap) sequential grid step.
    grid_n = 2 if M % 256 == 0 else 1
    M_blk = M // grid_n

    cost = pl.CostEstimate(
        flops=2 * M * Kdim * Cout,
        transcendentals=0,
        bytes_accessed=(cols_t.size * 2 + w_bf.size * 2 + b_col.size * 4
                        + M * Cout * x_nchw.dtype.itemsize),
    )

    out_t = pl.pallas_call(
        conv_block_kernel,
        out_shape=jax.ShapeDtypeStruct((Cout, M), x_nchw.dtype),
        grid_spec=pltpu.PrefetchScalarGridSpec(
            num_scalar_prefetch=0,
            grid=(grid_n,),
            in_specs=[
                pl.BlockSpec((Kdim, M_blk), lambda i: (0, i)),
                pl.BlockSpec((Cout, Kdim), lambda i: (0, 0)),
                pl.BlockSpec((Cout, 1), lambda i: (0, 0)),
            ],
            out_specs=pl.BlockSpec((Cout, M_blk), lambda i: (0, i)),
        ),
        compiler_params=pltpu.CompilerParams(
            dimension_semantics=("parallel",)),
        cost_estimate=cost,
    )(cols_t, w_bf, b_col)

    # (Cout, N*Ho*Wo) -> (N, Cout, Ho, Wo)
    return jnp.transpose(out_t.reshape(Cout, N, Ho, Wo), (1, 0, 2, 3))


if __name__ == "__main__":
    # ConvBlock(in_channels=4, out_channels=8, kernel_size=3, stride=1,
    #           padding=1, use_bn=False, activation=nn.ReLU())
    N, Cin, H, W = 2, 4, 16, 16
    Cout, K, stride, padding = 8, 3, 1, 1

    key = jax.random.PRNGKey(0)
    kx, kw, kb = jax.random.split(key, 3)
    x = jax.random.normal(kx, (N, Cin, H, W), dtype=jnp.float32)
    # Deterministic synthetic parameters (PyTorch OIHW weight layout).
    w = jax.random.normal(kw, (Cout, Cin, K, K), dtype=jnp.float32) * 0.1
    b = jax.random.normal(kb, (Cout,), dtype=jnp.float32) * 0.1

    out = conv_block(x, w, b, stride=stride, padding=padding)
    out = jax.block_until_ready(out)
    assert out.shape == (N, Cout, H, W)

    def ref_conv(xx, ww, precision=None):
        r = jax.lax.conv_general_dilated(
            xx, ww, window_strides=(stride, stride),
            padding=[(padding, padding), (padding, padding)],
            dimension_numbers=("NCHW", "OIHW", "NCHW"),
            precision=precision)
        return jnp.maximum(r + b[None, :, None, None], 0.0)

    # Tight check against a reference using the same bf16-rounded MXU inputs
    # (accumulation / epilogue are f32 in both -> differences are ~1e-6).
    xb = x.astype(jnp.bfloat16).astype(jnp.float32)
    wb = w.astype(jnp.bfloat16).astype(jnp.float32)
    assert jnp.allclose(out, ref_conv(xb, wb), atol=1e-3, rtol=1e-3)

    # Loose check against the full-f32 module semantics (slack only covers the
    # bf16 rounding of the matmul inputs).
    assert jnp.allclose(out, ref_conv(x, w, precision=jax.lax.Precision.HIGHEST),
                        atol=3e-2, rtol=3e-2)

    # TODO(synk): BatchNorm2d (use_bn=True) branch not exercised; it would fold
    # into a per-channel scale/shift applied in-kernel before the activation.
    print("KERNEL_OK")
</pallas_src>

<mosaic_0001>
module attributes {stable_mosaic.version = 11 : i64} {
  func.func @conv_block_kernel(%arg0: i32, %arg1: memref<36x256xbf16, #tpu.memory_space<vmem>>, %arg2: memref<8x36xbf16, #tpu.memory_space<vmem>>, %arg3: memref<8x1xf32, #tpu.memory_space<vmem>>, %arg4: memref<8x256xf32, #tpu.memory_space<vmem>>) attributes {dimension_semantics = [#tpu.dimension_semantics<parallel>], iteration_bounds = array<i64: 2>, scalar_prefetch = 0 : i64, scratch_operands = 0 : i64, tpu.core_type = #tpu.core_type<tc>, window_params = [{transform_indices = @transform_0, window_bounds = array<i64: 36, 256>}, {pipeline_mode = #tpu.pipeline_mode<synchronous>, transform_indices = @transform_1, window_bounds = array<i64: 8, 36>}, {pipeline_mode = #tpu.pipeline_mode<synchronous>, transform_indices = @transform_2, window_bounds = array<i64: 8, 1>}, {transform_indices = @transform_3, window_bounds = array<i64: 8, 256>}]} {
    %c0 = arith.constant 0 : index
    %c0_0 = arith.constant 0 : index
    %0 = vector.load %arg2[%c0, %c0_0] : memref<8x36xbf16, #tpu.memory_space<vmem>>, vector<8x36xbf16>
    %c0_1 = arith.constant 0 : index
    %c0_2 = arith.constant 0 : index
    %1 = vector.load %arg1[%c0_1, %c0_2] : memref<36x256xbf16, #tpu.memory_space<vmem>>, vector<36x256xbf16>
    %cst = arith.constant dense<0.000000e+00> : vector<8x256xf32>
    %2 = tpu.matmul %0, %1, %cst {dimension_numbers = #tpu.dot_dimension_numbers<[1], [0], [0], [1], [0, 0, 1, 1], [], []>} : vector<8x36xbf16>, vector<36x256xbf16>, vector<8x256xf32> -> vector<8x256xf32>
    %c0_3 = arith.constant 0 : index
    %c0_4 = arith.constant 0 : index
    %3 = vector.load %arg3[%c0_3, %c0_4] : memref<8x1xf32, #tpu.memory_space<vmem>>, vector<8x1xf32>
    %4 = vector.broadcast %3 : vector<8x1xf32> to vector<8x256xf32>
    %5 = arith.addf %2, %4 : vector<8x256xf32>
    %cst_5 = arith.constant 0.000000e+00 : f32
    %6 = vector.broadcast %cst_5 : f32 to vector<8x256xf32>
    %7 = arith.maximumf %5, %6 : vector<8x256xf32>
    %c0_6 = arith.constant 0 : index
    %c0_7 = arith.constant 0 : index
    %8 = vector.load %arg4[%c0_6, %c0_7] : memref<8x256xf32, #tpu.memory_space<vmem>>, vector<8x256xf32>
    tpu.vector_store %arg4[%c0_6, %c0_7], %7 {strides = array<i32>} : memref<8x256xf32, #tpu.memory_space<vmem>>, vector<8x256xf32>,
    return
  }
  func.func @transform_0(%arg0: i32) -> (i32, i32) {
    %c0_i32 = arith.constant 0 : i32
    %c0_i32_0 = arith.constant 0 : i32
    return %c0_i32, %arg0 : i32, i32
  }
  func.func @transform_1(%arg0: i32) -> (i32, i32) {
    %c0_i32 = arith.constant 0 : i32
    %c0_i32_0 = arith.constant 0 : i32
    %c0_i32_1 = arith.constant 0 : i32
    return %c0_i32, %c0_i32_0 : i32, i32
  }
  func.func @transform_2(%arg0: i32) -> (i32, i32) {
    %c0_i32 = arith.constant 0 : i32
    %c0_i32_0 = arith.constant 0 : i32
    %c0_i32_1 = arith.constant 0 : i32
    return %c0_i32, %c0_i32_0 : i32, i32
  }
  func.func @transform_3(%arg0: i32) -> (i32, i32) {
    %c0_i32 = arith.constant 0 : i32
    %c0_i32_0 = arith.constant 0 : i32
    return %c0_i32, %arg0 : i32, i32
  }
}

</mosaic_0001>

<llo_original>
// kernel: tpu_custom_call.1
$region0: #{tpu_custom_call.1}
  #allocation0 [shape = 'u32[]', space=smem, size = 0x4, offset = 0x4, fixed_abs, tag = 'smem constant byte address 0x4 - core index']
  #allocation1 [shape = 'u32[144,128]{1,0:T(1,128)}', space=vmem, size = 0x12000, scoped, tag = 'internal scratch']
  %s0 = inlined_call_operand.hbm [shape: bf16[36,512], index: 0, kind: input, shape index: {}]
  %s1 = inlined_call_operand.vmem [shape: bf16[8,36], index: 1, kind: input, shape index: {}]
  %s2 = inlined_call_operand.vmem [shape: f32[8,1], index: 2, kind: input, shape index: {}]
  %s3 = inlined_call_operand.hbm [shape: f32[8,512], index: 3, kind: output, shape index: {}]
  %s4 = sld [smem:[#allocation0]]
  $region49: #{tpu_custom_call.1} parent=0
    _
  %s6 = ssub.s32 1, %s4
  %s7 = scalar_select 0, %s6, %s4
  $region1: #{tpu_custom_call.1} parent=0
    #allocation2 [shape = 'u8[40960]{0}', space=vmem, size = 0xa000, scoped, tag = 'input window, operand 0']
    #allocation3 [shape = 's32[2]{0}', space=sflag, size = 0x8, scoped, tag = 'scoped memory for tpu_custom_call.1']
    #allocation4 [shape = 's32[2]{0}', space=sflag, size = 0x8, scoped, tag = 'scoped memory for tpu_custom_call.1']
    #allocation5 [shape = 'u8[16384]{0}', space=vmem, size = 0x4000, scoped, tag = 'output window, operand 0']
    %8 = vsyncpa [#allocation3], 0
    %s9 = scalar_lea.sflag [#allocation3], 1
    %10 = vsyncpa %s9, 0
    %11 = vsyncpa [#allocation4], 0
    %s12 = scalar_lea.sflag [#allocation4], 1
    %13 = vsyncpa %s12, 0
    loop: start=0, step=1, limit=4
    $region2: #{tpu_custom_call.1} parent=1 // loop_pre_header
      _
    $region3: #{tpu_custom_call.1} parent=1 // loop_header
      %s15 = sphi 0, %s19
      %p16 = scmp.ge.s32.totalorder %s15, 4
      %s25 = sphi 0, %s27
      %s28 = sphi 0, %s25
      %s29 = sphi 0, %s28
      %s45 = sphi 0, %s29
      %s49 = sphi 0, %s49
      %s51 = sphi 0, %s49
      %s52 = sphi 0, %s51
      %s66 = sphi 0, %s52
      %s70 = sphi 0, %s70
      %s72 = sphi 0, %s70
      %s73 = sphi 0, %s72
      %s87 = sphi 0, %s73
      %s93 = sphi 0, %s95
      %s96 = sphi 0, %s93
      %s97 = sphi 0, %s96
      %s113 = sphi 0, %s97
    $region4: #{tpu_custom_call.1} parent=1 // loop_header_branch
      %18 = sbr.rel (%p16) target = $region8
    $region5: #{tpu_custom_call.1} parent=1 // loop_body
      %s20 = ssub.s32 %s15, 1
      %s21 = ssub.s32 %s15, 2
      %s22 = sadd.s32 %s15, 1
      %s23 = ssub.s32 %s15, %s22
      %p24 = scmp.eq.s32.totalorder %s23, 0
      %s26 = sadd.s32 %s25, 1
      %s27 = scalar_select %p24, %s25, %s26
      %p30 = pneg %p24
      %p31 = scmp.eq.s32.totalorder %s15, 1
      %p32 = por %p30, %p31
      %p33 = scmp.ne.s32.totalorder %s25, %s28
      %p34 = scmp.eq.s32.totalorder %s15, 0
      %p35 = por %p33, %p34
      %p36 = scmp.ne.s32.totalorder %s25, %s28
      %p37 = scmp.eq.s32.totalorder %s20, 1
      %p38 = por %p36, %p37
      %p39 = scmp.ne.s32.totalorder %s28, %s29
      %p40 = scmp.eq.s32.totalorder %s20, 0
      %p41 = por %p39, %p40
      %p42 = scmp.ne.s32.totalorder %s28, %s29
      %p43 = scmp.eq.s32.totalorder %s21, 1
      %p44 = por %p42, %p43
      %p46 = scmp.ne.s32.totalorder %s29, %s45
      %p47 = scmp.eq.s32.totalorder %s21, 0
      %p48 = por %p46, %p47
      %s50 = sadd.s32 %s49, 1
      %p53 = scmp.eq.s32.totalorder %s15, 1
      %p54 = scmp.ne.s32.totalorder %s49, %s51
      %p55 = scmp.eq.s32.totalorder %s15, 0
      %p56 = por %p54, %p55
      %p57 = scmp.ne.s32.totalorder %s49, %s51
      %p58 = scmp.eq.s32.totalorder %s20, 1
      %p59 = por %p57, %p58
      %p60 = scmp.ne.s32.totalorder %s51, %s52
      %p61 = scmp.eq.s32.totalorder %s20, 0
      %p62 = por %p60, %p61
      %p63 = scmp.ne.s32.totalorder %s51, %s52
      %p64 = scmp.eq.s32.totalorder %s21, 1
      %p65 = por %p63, %p64
      %p67 = scmp.ne.s32.totalorder %s52, %s66
      %p68 = scmp.eq.s32.totalorder %s21, 0
      %p69 = por %p67, %p68
      %s71 = sadd.s32 %s70, 1
      %p74 = scmp.eq.s32.totalorder %s15, 1
      %p75 = scmp.ne.s32.totalorder %s70, %s72
      %p76 = scmp.eq.s32.totalorder %s15, 0
      %p77 = por %p75, %p76
      %p78 = scmp.ne.s32.totalorder %s70, %s72
      %p79 = scmp.eq.s32.totalorder %s20, 1
      %p80 = por %p78, %p79
      %p81 = scmp.ne.s32.totalorder %s72, %s73
      %p82 = scmp.eq.s32.totalorder %s20, 0
      %p83 = por %p81, %p82
      %p84 = scmp.ne.s32.totalorder %s72, %s73
      %p85 = scmp.eq.s32.totalorder %s21, 1
      %p86 = por %p84, %p85
      %p88 = scmp.ne.s32.totalorder %s73, %s87
      %p89 = scmp.eq.s32.totalorder %s21, 0
      %p90 = por %p88, %p89
      %s91 = ssub.s32 %s15, %s22
      %p92 = scmp.eq.s32.totalorder %s91, 0
      %s94 = sadd.s32 %s93, 1
      %s95 = scalar_select %p92, %s93, %s94
      %p98 = pneg %p92
      %p99 = scmp.eq.s32.totalorder %s15, 1
      %p100 = por %p98, %p99
      %p101 = scmp.ne.s32.totalorder %s93, %s96
      %p102 = scmp.eq.s32.totalorder %s15, 0
      %p103 = por %p101, %p102
      %p104 = scmp.ne.s32.totalorder %s93, %s96
      %p105 = scmp.eq.s32.totalorder %s20, 1
      %p106 = por %p104, %p105
      %p107 = scmp.ne.s32.totalorder %s96, %s97
      %p108 = scmp.eq.s32.totalorder %s20, 0
      %p109 = por %p107, %p108
      %p110 = scmp.ne.s32.totalorder %s96, %s97
      %p111 = scmp.eq.s32.totalorder %s21, 1
      %p112 = por %p110, %p111
      %p114 = scmp.ne.s32.totalorder %s97, %s113
      %p115 = scmp.eq.s32.totalorder %s21, 0
      %p116 = por %p114, %p115
      %p117 = scmp.le.s32.totalorder 1, %s15
      %p118 = scmp.lt.s32.totalorder %s15, 3
      %p119 = pnand %p117, %p118
      %p120 = pneg %p119
      // Predicated region
      $region9: #{tpu_custom_call.1} parent=5 // pred_check
        _
      $region10: #{tpu_custom_call.1} parent=5 // pred_check_branch
        %122 = sbr.rel (%p119) target = $region12
      $region11: #{tpu_custom_call.1} parent=5 // pred_region
        %s123 = ssub.s32 %s15, 1
        // Predicated region
        $region13: #{tpu_custom_call.1} parent=11 // pred_check
          %p124 = pneg %p62
        $region14: #{tpu_custom_call.1} parent=11 // pred_check_branch
          %126 = sbr.rel (%p124) target = $region16
        $region15: #{tpu_custom_call.1} parent=11 // pred_region
          _
        $region16: #{tpu_custom_call.1} parent=11 // pred_fallthru
          _
        // Predicated region
        $region17: #{tpu_custom_call.1} parent=11 // pred_check
          %p127 = pneg %p83
        $region18: #{tpu_custom_call.1} parent=11 // pred_check_branch
          %129 = sbr.rel (%p127) target = $region20
        $region19: #{tpu_custom_call.1} parent=11 // pred_region
          _
        $region20: #{tpu_custom_call.1} parent=11 // pred_fallthru
          _
      $region12: #{tpu_custom_call.1} parent=5 // pred_fallthru
        _
      %p130 = scmp.lt.s32.totalorder %s15, 2
      // Predicated region
      $region21: #{tpu_custom_call.1} parent=5 // pred_check
        %p131 = pneg %p130
      $region22: #{tpu_custom_call.1} parent=5 // pred_check_branch
        %133 = sbr.rel (%p131) target = $region24
      $region23: #{tpu_custom_call.1} parent=5 // pred_region
        // Predicated region
        $region25: #{tpu_custom_call.1} parent=23 // pred_check
          %p134 = pneg %p35
        $region26: #{tpu_custom_call.1} parent=23 // pred_check_branch
          %136 = sbr.rel (%p134) target = $region28
        $region27: #{tpu_custom_call.1} parent=23 // pred_region
          %s137 = sand.u32 %s25, 1
          %s138 = scalar_lea.sflag [#allocation3], %s137
          %s139 = sand.u32 %s25, 1
          %s140 = smul.addr %s139, 40
          %s141 = scalar_lea.vmem [#allocation2], %s140
          %s142 = smul.u32 2, %s15
          %s144 = ssub.s32 640, 640
          %145 = vsyncadd %s138, %s144
          %s146 = smul.addr %s142, 64
          %s147 = scalar_lea.hbm %s0, %s146
          %s148 = sshll.u32 %s141, 4
          %s149 = int_to_ptr.vmem [resolvable:$true] %s148
          %154 = dma.hbm_to_vmem [thread:$0]  %s147, 640, %s149, %s138, 256, 128, 8
        $region28: #{tpu_custom_call.1} parent=23 // pred_fallthru
          _
      $region24: #{tpu_custom_call.1} parent=5 // pred_fallthru
        _
      %p155 = scmp.le.s32.totalorder 1, %s15
      %p156 = scmp.lt.s32.totalorder %s15, 3
      %p157 = pnand %p155, %p156
      %p158 = pneg %p157
      // Predicated region
      $region29: #{tpu_custom_call.1} parent=5 // pred_check
        _
      $region30: #{tpu_custom_call.1} parent=5 // pred_check_branch
        %160 = sbr.rel (%p157) target = $region32
      $region31: #{tpu_custom_call.1} parent=5 // pred_region
        %s161 = ssub.s32 %s15, 1
        %s162 = sand.u32 %s28, 1
        %s163 = scalar_lea.sflag [#allocation3], %s162
        %s164 = sand.u32 %s28, 1
        %s165 = smul.addr %s164, 40
        %s166 = scalar_lea.vmem [#allocation2], %s165
        // Predicated region
        $region33: #{tpu_custom_call.1} parent=31 // pred_check
          %p167 = pneg %p41
        $region34: #{tpu_custom_call.1} parent=31 // pred_check_branch
          %169 = sbr.rel (%p167) target = $region36
        $region35: #{tpu_custom_call.1} parent=31 // pred_region
          %170 = dma.done %s163, 640
        $region36: #{tpu_custom_call.1} parent=31 // pred_fallthru
          _
        %s171 = sand.u32 %s28, 1
        %s172 = scalar_lea.sflag [#allocation3], %s171
        %s173 = sand.u32 %s28, 1
        %s174 = smul.addr %s173, 40
        %s175 = scalar_lea.vmem [#allocation2], %s174
        %p176 = pneg %p41
        %p177 = pneg %p38
        %p178 = pneg %p62
        %p179 = pneg %p59
        %p180 = pneg %p83
        %p181 = pneg %p80
        %p182 = pneg %p109
        %p183 = pneg %p106
        %s184 = sand.u32 %s96, 1
        %s185 = scalar_lea.sflag [#allocation4], %s184
        %s186 = sand.u32 %s96, 1
        %s187 = smul.addr %s186, 16
        %s188 = scalar_lea.vmem [#allocation5], %s187
        %s189 = smul.u32 2, %s20
        %s190 = smul.u32 2, %s20
        %v192 = vld [vmem:[%s1] sm:$0xf]
        %v193 = vld [vmem:[%s166] sm:$0xff]
        %v194 = vld [vmem:[%s166 + $0x8] sm:$0xff]
        %v195 = vld [vmem:[%s166 + $0x10] sm:$0xff]
        %v196 = vld [vmem:[%s166 + $0x18] sm:$0xff]
        %v197 = vld [vmem:[%s166 + $0x20] sm:$0x33]
        %v198 = vld [vmem:[%s2] sm:$0xff]
        %200 = vset.pattern.permute.xlu0 0
        %201 = vperm.xlu0 %200, %v198
        %v202 = vpop.permute.xlu0 %201
        %v209 = vunpack.c.l.b16 %v193
        %v210 = vunpack.c.h.b16 %v193
        %v211 = vunpack.c.l.b16 %v194
        %v212 = vunpack.c.h.b16 %v194
        %v213 = vunpack.c.l.b16 %v195
        %v214 = vunpack.c.h.b16 %v195
        %v215 = vunpack.c.l.b16 %v196
        %v216 = vunpack.c.h.b16 %v196
        %v217 = vunpack.c.l.b16 %v197
        %v218 = vunpack.c.h.b16 %v197
        %v219 = vpack.c.b16 %v211, %v209
        %v220 = vpack.c.b16 %v212, %v210
        %v221 = vpack.c.b16 %v215, %v213
        %v222 = vpack.c.b16 %v216, %v214
        %v223 = vpack.c.b16 %v217, %v217
        %v224 = vpack.c.b16 %v218, %v218
        %vm229 = vcmask 293888
        %v231 = vsel %vm229, %v192, 0
        %vm233 = vcmask 1041408
        %v235 = vsel %vm233, %v223, 0
        %v238 = vsel %vm233, %v224, 0
        %240 = vmatprep.subr.bf16.mxu0 0
        %241 = vmatpush1.bf16.msra.mxu0 0
        %242 = vmatprep.subr.bf16.mxu0 0
        %243 = vmatpush1.bf16.msra.mxu0 0
        %244 = vmatprep.subr.bf16.mxu0 0
        %245 = vmatpush1.bf16.msra.mxu0 0
        %246 = vmatprep.subr.bf16.mxu0 0
        %247 = vmatpush1.bf16.msra.mxu0 0
        %248 = vmatprep.subr.bf16.mxu0 0
        %249 = vmatpush1.bf16.msra.mxu0 0
        %250 = vmatprep.subr.bf16.mxu0 %v238
        %251 = vmatpush1.bf16.msra.mxu0 %v235
        %252 = vmatprep.subr.bf16.mxu0 %v222
        %253 = vmatpush1.bf16.msra.mxu0 %v221
        %254 = vmatprep.subr.bf16.mxu0 %v220
        %255 = vmatpush1.bf16.msra.mxu0 %v219
        %256 = vmatprep.subr.bf16.mxu0 0
        %257 = vmatpush2.bf16.msra.mxu0 0
        %258 = vmatprep.subr.bf16.mxu0 0
        %259 = vmatpush2.bf16.msra.mxu0 0
        %260 = vmatprep.subr.bf16.mxu0 0
        %261 = vmatpush2.bf16.msra.mxu0 0
        %262 = vmatprep.subr.bf16.mxu0 0
        %263 = vmatpush2.bf16.msra.mxu0 0
        %264 = vmatprep.subr.bf16.mxu0 0
        %265 = vmatpush2.bf16.msra.mxu0 0
        %266 = vmatprep.subr.bf16.mxu0 0
        %267 = vmatpush2.bf16.msra.mxu0 0
        %268 = vmatprep.subr.bf16.mxu0 0
        %269 = vmatpush2.bf16.msra.mxu0 0
        %270 = vmatprep.subr.bf16.mxu0 0
        %271 = vmatpush2.bf16.msra.mxu0 0
        %272 = vmatprep.mubr.bf16.mxu0 0
        %273 = vmatmul.mubr.bf16.gmra.mxu0 %v231
        %v274 = vpop.f32.mrf.mxu0
        %v275 = vadd.f32 %v202, %v274
        %v276 = vpop.f32.mrf.mxu0
        %v277 = vadd.f32 %v202, %v276
        %v278 = vpop.f32.mrf.mxu0
        %v279 = vpop.f32.mrf.mxu0
        %280 = vdwg.mxu0
        %v281 = vmax.f32 %v275, 0.0
        %v282 = vmax.f32 %v277, 0.0
        %283 = vst [vmem:[%s188] sm:$0xff] %v281
        %284 = vst [vmem:[%s188 + $0x8] sm:$0xff] %v282
        %s285 = sand.u32 %s96, 1
        %s286 = scalar_lea.sflag [#allocation4], %s285
        %s287 = sand.u32 %s96, 1
        %s288 = smul.addr %s287, 16
        %s289 = scalar_lea.vmem [#allocation5], %s288
        // Predicated region
        $region37: #{tpu_custom_call.1} parent=31 // pred_check
          %p290 = pneg %p106
        $region38: #{tpu_custom_call.1} parent=31 // pred_check_branch
          %292 = sbr.rel (%p290) target = $region40
        $region39: #{tpu_custom_call.1} parent=31 // pred_region
          %s293 = smul.u32 2, %s20
          %s295 = ssub.s32 256, 256
          %296 = vsyncadd %s286, %s295
          %s297 = smul.addr %s293, 128
          %s298 = scalar_lea.hbm %s3, %s297
          %s300 = sshll.u32 %s289, 4
          %s301 = int_to_ptr.vmem [resolvable:$true] %s300
          %303 = dma.vmem_to_hbm [thread:$0]  %s301, 256, %s298, %s286
        $region40: #{tpu_custom_call.1} parent=31 // pred_fallthru
          _
      $region32: #{tpu_custom_call.1} parent=5 // pred_fallthru
        _
      %p304 = scmp.le.s32.totalorder 2, %s15
      // Predicated region
      $region41: #{tpu_custom_call.1} parent=5 // pred_check
        %p305 = pneg %p304
      $region42: #{tpu_custom_call.1} parent=5 // pred_check_branch
        %307 = sbr.rel (%p305) target = $region44
      $region43: #{tpu_custom_call.1} parent=5 // pred_region
        %s308 = ssub.s32 %s15, 2
        // Predicated region
        $region45: #{tpu_custom_call.1} parent=43 // pred_check
          %p309 = pneg %p112
        $region46: #{tpu_custom_call.1} parent=43 // pred_check_branch
          %311 = sbr.rel (%p309) target = $region48
        $region47: #{tpu_custom_call.1} parent=43 // pred_region
          %s312 = sand.u32 %s97, 1
          %s313 = scalar_lea.sflag [#allocation4], %s312
          %s314 = sand.u32 %s97, 1
          %s315 = smul.addr %s314, 16
          %s316 = scalar_lea.vmem [#allocation5], %s315
          %317 = dma.done %s313, 256
        $region48: #{tpu_custom_call.1} parent=43 // pred_fallthru
          _
      $region44: #{tpu_custom_call.1} parent=5 // pred_fallthru
        _
    $region6: #{tpu_custom_call.1} parent=1 // loop_footer
      %s19 = sadd.s32 1, %s15
    $region7: #{tpu_custom_call.1} parent=1 // loop_footer_branch
      %14 = sbr.rel target = $region3
    $region8: #{tpu_custom_call.1} parent=1 // loop_exit
      _
    %318 = vsyncpa [#allocation3], 1
    %s319 = scalar_lea.sflag [#allocation3], 1
    %320 = vsyncpa %s319, 1
    %321 = vsyncpa [#allocation4], 1
    %s322 = scalar_lea.sflag [#allocation4], 1
    %323 = vsyncpa %s322, 1

</llo_original>
